<compile_context>
chip_gen: v5e
topology: v5e:2x2
jax: 0.10.0
libtpu: 0.0.40
codegen_flags: <defaults>
</compile_context>

<pallas_src>
import math
import jax
import jax.numpy as jnp
from jax.experimental import pallas as pl
from jax.experimental.pallas import tpu as pltpu


# ----------------------------- Pallas kernel ------------------------------- #
def _sparse_linear_kernel(x_ref, wt_ref, b_ref, o_ref, acc_ref):
    # x_ref:  (tm, tk)  bf16/f32 tile of flattened inputs
    # wt_ref: (tk, tn)  bf16/f32 tile of densified W^T
    # b_ref:  (1,  tn)  f32 bias row (broadcast over tm)
    # o_ref:  (tm, tn)  output tile (input dtype)
    # acc_ref:(tm, tn)  f32 accumulator scratch (persists across the K axis)
    k = pl.program_id(2)

    @pl.when(k == 0)
    def _():
        acc_ref[...] = jnp.zeros_like(acc_ref)

    acc_ref[...] += jnp.dot(
        x_ref[...], wt_ref[...], preferred_element_type=jnp.float32
    )

    @pl.when(k == pl.num_programs(2) - 1)
    def _():
        # Bias add stays in f32 (no bf16 VPU path on v5e); cast only at the end.
        o_ref[...] = (acc_ref[...] + b_ref[...]).astype(o_ref.dtype)


# ------------------------------- Wrapper ------------------------------------ #
def _round_up(a, b):
    return ((a + b - 1) // b) * b


def _pick_tile(total, candidates):
    for c in candidates:
        if total % c == 0:
            return c
    return candidates[-1]


def sparse_linear_forward(x, w_dense, bias, *, compute_dtype=jnp.bfloat16):
    """y = x @ w_dense.T + bias for x of shape (..., in_features)."""
    out_features, in_features = w_dense.shape
    orig_shape = x.shape
    orig_dtype = x.dtype

    x2d = x.reshape(-1, in_features)          # flatten(end_dim=-2)
    M, K = x2d.shape
    N = out_features

    # Lane/sublane-aligned padded problem sizes.
    K_pad = _round_up(K, 128)
    N_pad = _round_up(N, 128)

    # Tile selection: tm multiple of 8 (single block for small M, 256 rows
    # otherwise); tk/tn multiples of 128 that divide the padded extents.
    tm = _round_up(M, 8) if M <= 256 else 256
    M_pad = _round_up(M, tm)
    tk = _pick_tile(K_pad, (512, 384, 256, 128))
    tn = _pick_tile(N_pad, (256, 128))

    # Zero-pad operands (zero rows/cols contribute nothing to the matmul).
    xp = jnp.zeros((M_pad, K_pad), compute_dtype).at[:M, :K].set(
        x2d.astype(compute_dtype))
    wt = jnp.zeros((K_pad, N_pad), compute_dtype).at[:K, :N].set(
        w_dense.T.astype(compute_dtype))
    bp = jnp.zeros((1, N_pad), jnp.float32).at[0, :N].set(
        bias.astype(jnp.float32))

    grid = (M_pad // tm, N_pad // tn, K_pad // tk)

    # VMEM budget: 2x buffers for pipelined operands + f32 accumulator.
    cdt_size = jnp.dtype(compute_dtype).itemsize
    out_size = jnp.dtype(orig_dtype).itemsize
    working = (2 * (tm * tk * cdt_size + tk * tn * cdt_size
                    + tn * 4 + tm * tn * out_size)
               + tm * tn * 4)
    vmem_limit = int(min(48 * 2 ** 20, max(8 * 2 ** 20, 2 * working)))

    cost = pl.CostEstimate(
        flops=2 * M_pad * K_pad * N_pad,
        transcendentals=0,
        bytes_accessed=(xp.size * cdt_size + wt.size * cdt_size
                        + bp.size * 4 + M_pad * N_pad * out_size),
    )

    out = pl.pallas_call(
        _sparse_linear_kernel,
        out_shape=jax.ShapeDtypeStruct((M_pad, N_pad), orig_dtype),
        grid_spec=pltpu.PrefetchScalarGridSpec(
            num_scalar_prefetch=0,
            grid=grid,
            in_specs=[
                pl.BlockSpec((tm, tk), lambda i, j, k: (i, k)),   # x tile
                pl.BlockSpec((tk, tn), lambda i, j, k: (k, j)),   # W^T tile
                pl.BlockSpec((1, tn), lambda i, j, k: (0, j)),    # bias row
            ],
            out_specs=pl.BlockSpec((tm, tn), lambda i, j, k: (i, j)),
            scratch_shapes=[pltpu.VMEM((tm, tn), jnp.float32)],
        ),
        compiler_params=pltpu.CompilerParams(
            dimension_semantics=("parallel", "parallel", "arbitrary"),
            vmem_limit_bytes=vmem_limit,
        ),
        cost_estimate=cost,
    )(xp, wt, bp)

    return out[:M, :N].reshape(orig_shape[:-1] + (out_features,))


# -------------------------- Parameter construction ------------------------- #
def make_sparse_linear_params(key, in_features, out_features, sparsity=0.9):
    """Deterministic re-implementation of SparseLinear.__init__ parameter setup."""
    nnz = round((1.0 - sparsity) * in_features * out_features)
    k_idx, k_w, k_b = jax.random.split(key, 3)

    # sample nnz flat indices without replacement
    flat = jax.random.permutation(k_idx, in_features * out_features)[:nnz]
    row_ind = flat // in_features                       # out index
    col_ind = flat % in_features                        # in index

    bound = 1.0 / math.sqrt(in_features)
    values = jax.random.uniform(k_w, (nnz,), minval=-bound, maxval=bound,
                                dtype=jnp.float32)
    bias = jax.random.uniform(k_b, (out_features,), minval=-bound, maxval=bound,
                              dtype=jnp.float32)

    # densify sparse COO weight (coalesce == sum of duplicates; none here)
    w_dense = jnp.zeros((out_features, in_features), jnp.float32)
    w_dense = w_dense.at[row_ind, col_ind].add(values)
    return w_dense, bias


# ----------------------------------- Main ----------------------------------- #
if __name__ == "__main__":
    in_features = 32
    out_features = 48
    batch, seq = 2, 8            # input (N, *, H_in) = (2, 8, 32)

    key = jax.random.PRNGKey(0)
    k_params, k_x = jax.random.split(key)
    w_dense, bias = make_sparse_linear_params(k_params, in_features, out_features,
                                              sparsity=0.9)
    x = jax.random.normal(k_x, (batch, seq, in_features), dtype=jnp.float32)

    y = sparse_linear_forward(x, w_dense, bias)
    y = jax.block_until_ready(y)

    # reference (plain JAX, f32) check — tolerance loosened for bf16 inputs
    y_ref = x.reshape(-1, in_features) @ w_dense.T + bias
    y_ref = y_ref.reshape(batch, seq, out_features)
    assert y.shape == (batch, seq, out_features)
    assert jnp.allclose(y, y_ref, atol=2e-2, rtol=2e-2)

    print("KERNEL_OK")
</pallas_src>

<mosaic_0001>
module attributes {stable_mosaic.version = 11 : i64} {
  func.func @_sparse_linear_kernel(%arg0: i32, %arg1: i32, %arg2: i32, %arg3: memref<16x128xbf16, #tpu.memory_space<vmem>>, %arg4: memref<128x128xbf16, #tpu.memory_space<vmem>>, %arg5: memref<1x128xf32, #tpu.memory_space<vmem>>, %arg6: memref<16x128xf32, #tpu.memory_space<vmem>>, %arg7: memref<16x128xf32, #tpu.memory_space<vmem>>) attributes {dimension_semantics = [#tpu.dimension_semantics<parallel>, #tpu.dimension_semantics<parallel>, #tpu.dimension_semantics<arbitrary>], iteration_bounds = array<i64: 1, 1, 1>, scalar_prefetch = 0 : i64, scratch_operands = 1 : i64, tpu.core_type = #tpu.core_type<tc>, window_params = [{transform_indices = @transform_0, window_bounds = array<i64: 16, 128>}, {transform_indices = @transform_1, window_bounds = array<i64: 128, 128>}, {transform_indices = @transform_2, window_bounds = array<i64: 1, 128>}, {transform_indices = @transform_3, window_bounds = array<i64: 16, 128>}]} {
    %c0_i32 = arith.constant 0 : i32
    %0 = arith.cmpi eq, %arg2, %c0_i32 : i32
    %1 = arith.extui %0 : i1 to i32
    %c0_i32_0 = arith.constant 0 : i32
    %2 = arith.cmpi ne, %1, %c0_i32_0 : i32
    scf.if %2 {
      %cst_10 = arith.constant 0.000000e+00 : f32
      %12 = vector.broadcast %cst_10 : f32 to vector<16x128xf32>
      %c0_11 = arith.constant 0 : index
      %c0_12 = arith.constant 0 : index
      %13 = vector.load %arg7[%c0_11, %c0_12] : memref<16x128xf32, #tpu.memory_space<vmem>>, vector<16x128xf32>
      tpu.vector_store %arg7[%c0_11, %c0_12], %12 {strides = array<i32>} : memref<16x128xf32, #tpu.memory_space<vmem>>, vector<16x128xf32>,
    } else {
    }
    %c0 = arith.constant 0 : index
    %c0_1 = arith.constant 0 : index
    %3 = vector.load %arg7[%c0, %c0_1] : memref<16x128xf32, #tpu.memory_space<vmem>>, vector<16x128xf32>
    %c0_2 = arith.constant 0 : index
    %c0_3 = arith.constant 0 : index
    %4 = vector.load %arg3[%c0_2, %c0_3] : memref<16x128xbf16, #tpu.memory_space<vmem>>, vector<16x128xbf16>
    %c0_4 = arith.constant 0 : index
    %c0_5 = arith.constant 0 : index
    %5 = vector.load %arg4[%c0_4, %c0_5] : memref<128x128xbf16, #tpu.memory_space<vmem>>, vector<128x128xbf16>
    %cst = arith.constant dense<0.000000e+00> : vector<16x128xf32>
    %6 = tpu.matmul %4, %5, %cst {dimension_numbers = #tpu.dot_dimension_numbers<[1], [0], [0], [1], [0, 0, 1, 1], [], []>} : vector<16x128xbf16>, vector<128x128xbf16>, vector<16x128xf32> -> vector<16x128xf32>
    %7 = arith.addf %3, %6 : vector<16x128xf32>
    %c0_6 = arith.constant 0 : index
    %c0_7 = arith.constant 0 : index
    %8 = vector.load %arg7[%c0_6, %c0_7] : memref<16x128xf32, #tpu.memory_space<vmem>>, vector<16x128xf32>
    tpu.vector_store %arg7[%c0_6, %c0_7], %7 {strides = array<i32>} : memref<16x128xf32, #tpu.memory_space<vmem>>, vector<16x128xf32>,
    %c0_i32_8 = arith.constant 0 : i32
    %9 = arith.cmpi eq, %arg2, %c0_i32_8 : i32
    %10 = arith.extui %9 : i1 to i32
    %c0_i32_9 = arith.constant 0 : i32
    %11 = arith.cmpi ne, %10, %c0_i32_9 : i32
    scf.if %11 {
      %c0_10 = arith.constant 0 : index
      %c0_11 = arith.constant 0 : index
      %12 = vector.load %arg7[%c0_10, %c0_11] : memref<16x128xf32, #tpu.memory_space<vmem>>, vector<16x128xf32>
      %c0_12 = arith.constant 0 : index
      %c0_13 = arith.constant 0 : index
      %13 = vector.load %arg5[%c0_12, %c0_13] : memref<1x128xf32, #tpu.memory_space<vmem>>, vector<1x128xf32>
      %14 = vector.broadcast %13 : vector<1x128xf32> to vector<16x128xf32>
      %15 = arith.addf %12, %14 : vector<16x128xf32>
      %c0_14 = arith.constant 0 : index
      %c0_15 = arith.constant 0 : index
      %16 = vector.load %arg6[%c0_14, %c0_15] : memref<16x128xf32, #tpu.memory_space<vmem>>, vector<16x128xf32>
      tpu.vector_store %arg6[%c0_14, %c0_15], %15 {strides = array<i32>} : memref<16x128xf32, #tpu.memory_space<vmem>>, vector<16x128xf32>,
    } else {
    }
    return
  }
  func.func @transform_0(%arg0: i32, %arg1: i32, %arg2: i32) -> (i32, i32) {
    %c0_i32 = arith.constant 0 : i32
    return %arg0, %arg2 : i32, i32
  }
  func.func @transform_1(%arg0: i32, %arg1: i32, %arg2: i32) -> (i32, i32) {
    %c0_i32 = arith.constant 0 : i32
    return %arg2, %arg1 : i32, i32
  }
  func.func @transform_2(%arg0: i32, %arg1: i32, %arg2: i32) -> (i32, i32) {
    %c0_i32 = arith.constant 0 : i32
    %c0_i32_0 = arith.constant 0 : i32
    return %c0_i32, %arg1 : i32, i32
  }
  func.func @transform_3(%arg0: i32, %arg1: i32, %arg2: i32) -> (i32, i32) {
    %c0_i32 = arith.constant 0 : i32
    return %arg0, %arg1 : i32, i32
  }
}

</mosaic_0001>

<llo_original>
// kernel: tpu_custom_call.1
$region0: #{tpu_custom_call.1}
  #allocation0 [shape = 'u32[]', space=smem, size = 0x4, offset = 0x4, fixed_abs, tag = 'smem constant byte address 0x4 - core index']
  #allocation1 [shape = 'u32[72,128]{1,0:T(1,128)}', space=vmem, size = 0x9000, scoped, tag = 'internal scratch']
  #allocation2 [shape = 'f32[16,128]{1,0:T(8,128)}', space=vmem, size = 0x2000, scoped, tag = 'scratch operand']
  %s0 = inlined_call_operand.hbm [shape: bf16[16,128], index: 0, kind: input, shape index: {}]
  %s1 = inlined_call_operand.hbm [shape: bf16[128,128], index: 1, kind: input, shape index: {}]
  %s2 = inlined_call_operand.vmem [shape: f32[1,128], index: 2, kind: input, shape index: {}]
  %s3 = inlined_call_operand.hbm [shape: f32[16,128], index: 3, kind: output, shape index: {}]
  %s4 = sld [smem:[#allocation0]]
  $region38: #{tpu_custom_call.1} parent=0
    _
  %s6 = ssub.s32 1, %s4
  %s7 = scalar_select 0, %s6, %s4
  $region1: #{tpu_custom_call.1} parent=0
    #allocation3 [shape = 'u8[4096]{0}', space=vmem, size = 0x1000, scoped, tag = 'input window, operand 0, single buffered']
    #allocation4 [shape = 's32[1]{0}', space=sflag, size = 0x4, scoped, tag = 'scoped memory for tpu_custom_call.1']
    #allocation5 [shape = 's32[1]{0}', space=sflag, size = 0x4, scoped, tag = 'scoped memory for tpu_custom_call.1']
    #allocation6 [shape = 'u8[32768]{0}', space=vmem, size = 0x8000, scoped, tag = 'input window, operand 1, single buffered']
    #allocation7 [shape = 's32[1]{0}', space=sflag, size = 0x4, scoped, tag = 'scoped memory for tpu_custom_call.1']
    #allocation8 [shape = 'u8[8192]{0}', space=vmem, size = 0x2000, scoped, tag = 'output window, operand 0, single buffered']
    %8 = vsyncpa [#allocation4], 0
    %9 = vsyncpa [#allocation7], 0
    %10 = vsyncpa [#allocation5], 0
    // Predicated region
    $region2: #{tpu_custom_call.1} parent=1 // pred_check
      _
    $region3: #{tpu_custom_call.1} parent=1 // pred_check_branch
      %12 = sbr.rel (0) target = $region5
    $region4: #{tpu_custom_call.1} parent=1 // pred_region
      %14 = vsyncadd [#allocation4], 0
      %s15 = sshll.u32 %s0, 4
      %s16 = int_to_ptr.hbm [resolvable:$true] %s15
      %s17 = sshll.u32 [#allocation3], 4
      %s18 = int_to_ptr.vmem [resolvable:$true] %s17
      %23 = dma.hbm_to_vmem [thread:$0]  %s16, 128, %s18, [#allocation4], 64, 64, 4
    $region5: #{tpu_custom_call.1} parent=1 // pred_fallthru
      _
    // Predicated region
    $region6: #{tpu_custom_call.1} parent=1 // pred_check
      _
    $region7: #{tpu_custom_call.1} parent=1 // pred_check_branch
      %25 = sbr.rel (0) target = $region9
    $region8: #{tpu_custom_call.1} parent=1 // pred_region
      %27 = vsyncadd [#allocation7], 0
      %s28 = sshll.u32 %s1, 4
      %s29 = int_to_ptr.hbm [resolvable:$true] %s28
      %s30 = sshll.u32 [#allocation6], 4
      %s31 = int_to_ptr.vmem [resolvable:$true] %s30
      %36 = dma.hbm_to_vmem [thread:$0]  %s29, 1024, %s31, [#allocation7], 64, 64, 4
    $region9: #{tpu_custom_call.1} parent=1 // pred_fallthru
      _
    // Predicated region
    $region10: #{tpu_custom_call.1} parent=1 // pred_check
      _
    $region11: #{tpu_custom_call.1} parent=1 // pred_check_branch
      %38 = sbr.rel (0) target = $region13
    $region12: #{tpu_custom_call.1} parent=1 // pred_region
      _
    $region13: #{tpu_custom_call.1} parent=1 // pred_fallthru
      _
    // Predicated region
    $region14: #{tpu_custom_call.1} parent=1 // pred_check
      _
    $region15: #{tpu_custom_call.1} parent=1 // pred_check_branch
      %40 = sbr.rel (0) target = $region17
    $region16: #{tpu_custom_call.1} parent=1 // pred_region
      %42 = dma.done [#allocation4], 128
    $region17: #{tpu_custom_call.1} parent=1 // pred_fallthru
      _
    // Predicated region
    $region18: #{tpu_custom_call.1} parent=1 // pred_check
      _
    $region19: #{tpu_custom_call.1} parent=1 // pred_check_branch
      %44 = sbr.rel (0) target = $region21
    $region20: #{tpu_custom_call.1} parent=1 // pred_region
      %46 = dma.done [#allocation7], 1024
    $region21: #{tpu_custom_call.1} parent=1 // pred_fallthru
      _
    %p47 = scmp.eq.s32.totalorder 0, 0
    // Predicated region
    $region22: #{tpu_custom_call.1} parent=1 // pred_check
      %p48 = pneg %p47
    $region23: #{tpu_custom_call.1} parent=1 // pred_check_branch
      %50 = sbr.rel (%p48) target = $region25
    $region24: #{tpu_custom_call.1} parent=1 // pred_region
      %51 = vst [vmem:[#allocation2] sm:$0xff] 0.0
      %52 = vst [vmem:[#allocation2 + $0x8] sm:$0xff] 0.0
    $region25: #{tpu_custom_call.1} parent=1 // pred_fallthru
      _
    %v53 = vld [vmem:[#allocation2] sm:$0xff]
    %v54 = vld [vmem:[#allocation2 + $0x8] sm:$0xff]
    %v55 = vld [vmem:[#allocation3] sm:$0xf]
    %v56 = vld [vmem:[#allocation3 + $0x4] sm:$0xf]
    %v57 = vld [vmem:[#allocation6] sm:$0xf]
    %v58 = vld [vmem:[#allocation6 + $0x4] sm:$0xf]
    %v59 = vld [vmem:[#allocation6 + $0x8] sm:$0xf]
    %v60 = vld [vmem:[#allocation6 + $0xc] sm:$0xf]
    %v61 = vld [vmem:[#allocation6 + $0x10] sm:$0xf]
    %v62 = vld [vmem:[#allocation6 + $0x14] sm:$0xf]
    %v63 = vld [vmem:[#allocation6 + $0x18] sm:$0xf]
    %v64 = vld [vmem:[#allocation6 + $0x1c] sm:$0xf]
    %v65 = vld [vmem:[#allocation6 + $0x20] sm:$0xf]
    %v66 = vld [vmem:[#allocation6 + $0x24] sm:$0xf]
    %v67 = vld [vmem:[#allocation6 + $0x28] sm:$0xf]
    %v68 = vld [vmem:[#allocation6 + $0x2c] sm:$0xf]
    %v69 = vld [vmem:[#allocation6 + $0x30] sm:$0xf]
    %v70 = vld [vmem:[#allocation6 + $0x34] sm:$0xf]
    %v71 = vld [vmem:[#allocation6 + $0x38] sm:$0xf]
    %v72 = vld [vmem:[#allocation6 + $0x3c] sm:$0xf]
    %v75 = vunpack.c.l.b16 %v55
    %v76 = vunpack.c.l.b16 %v56
    %v77 = vpack.c.b16 %v76, %v75
    %v95 = vunpack.c.l.b16 %v57
    %v96 = vunpack.c.l.b16 %v58
    %v97 = vunpack.c.l.b16 %v59
    %v98 = vunpack.c.l.b16 %v60
    %v99 = vunpack.c.l.b16 %v61
    %v100 = vunpack.c.l.b16 %v62
    %v101 = vunpack.c.l.b16 %v63
    %v102 = vunpack.c.l.b16 %v64
    %v103 = vunpack.c.l.b16 %v65
    %v104 = vunpack.c.l.b16 %v66
    %v105 = vunpack.c.l.b16 %v67
    %v106 = vunpack.c.l.b16 %v68
    %v107 = vunpack.c.l.b16 %v69
    %v108 = vunpack.c.l.b16 %v70
    %v109 = vunpack.c.l.b16 %v71
    %v110 = vunpack.c.l.b16 %v72
    %v111 = vpack.c.b16 %v96, %v95
    %v112 = vpack.c.b16 %v98, %v97
    %v113 = vpack.c.b16 %v100, %v99
    %v114 = vpack.c.b16 %v102, %v101
    %v115 = vpack.c.b16 %v104, %v103
    %v116 = vpack.c.b16 %v106, %v105
    %v117 = vpack.c.b16 %v108, %v107
    %v118 = vpack.c.b16 %v110, %v109
    %127 = vmatpush.bf16.msra.mxu0 %v118
    %128 = vmatpush.bf16.msra.mxu0 %v117
    %129 = vmatpush.bf16.msra.mxu0 %v116
    %130 = vmatpush.bf16.msra.mxu0 %v115
    %131 = vmatpush.bf16.msra.mxu0 %v114
    %132 = vmatpush.bf16.msra.mxu0 %v113
    %133 = vmatpush.bf16.msra.mxu0 %v112
    %134 = vmatpush.bf16.msra.mxu0 %v111
    %135 = vmatmul.bf16.gmra.mxu0 %v77
    %v136 = vpop.f32.mrf.mxu0
    %v137 = vadd.f32 0.0, %v136
    %v138 = vpop.f32.mrf.mxu0
    %v139 = vadd.f32 0.0, %v138
    %140 = vdwg.mxu0
    %v141 = vadd.f32 %v53, %v137
    %v142 = vadd.f32 %v54, %v139
    %143 = vst [vmem:[#allocation2] sm:$0xff] %v141
    %144 = vst [vmem:[#allocation2 + $0x8] sm:$0xff] %v142
    // Predicated region
    $region26: #{tpu_custom_call.1} parent=1 // pred_check
      %p145 = pneg %p47
    $region27: #{tpu_custom_call.1} parent=1 // pred_check_branch
      %147 = sbr.rel (%p145) target = $region29
    $region28: #{tpu_custom_call.1} parent=1 // pred_region
      %v148 = vld [vmem:[#allocation2] sm:$0xff]
      %v149 = vld [vmem:[#allocation2 + $0x8] sm:$0xff]
      %v150 = vld [vmem:[%s2] sm:$0x1]
      %v152 = vperm.slane %v150, 0
      %v154 = vadd.f32 %v148, %v152
      %v155 = vadd.f32 %v149, %v152
      %156 = vst [vmem:[#allocation8] sm:$0xff] %v154
      %157 = vst [vmem:[#allocation8 + $0x8] sm:$0xff] %v155
    $region29: #{tpu_custom_call.1} parent=1 // pred_fallthru
      _
    // Predicated region
    $region30: #{tpu_custom_call.1} parent=1 // pred_check
      _
    $region31: #{tpu_custom_call.1} parent=1 // pred_check_branch
      %159 = sbr.rel (0) target = $region33
    $region32: #{tpu_custom_call.1} parent=1 // pred_region
      %161 = vsyncadd [#allocation5], 0
      %s162 = sshll.u32 [#allocation8], 4
      %s163 = int_to_ptr.vmem [resolvable:$true] %s162
      %s164 = sshll.u32 %s3, 4
      %s165 = int_to_ptr.hbm [resolvable:$true] %s164
      %170 = dma.vmem_to_hbm [thread:$0]  %s163, 256, %s165, [#allocation5], 128, 128, 8
    $region33: #{tpu_custom_call.1} parent=1 // pred_fallthru
      _
    // Predicated region
    $region34: #{tpu_custom_call.1} parent=1 // pred_check
      _
    $region35: #{tpu_custom_call.1} parent=1 // pred_check_branch
      %172 = sbr.rel (0) target = $region37
    $region36: #{tpu_custom_call.1} parent=1 // pred_region
      %174 = dma.done [#allocation5], 256
    $region37: #{tpu_custom_call.1} parent=1 // pred_fallthru
      _
    %175 = vsyncpa [#allocation4], 1
    %176 = vsyncpa [#allocation7], 1
    %177 = vsyncpa [#allocation5], 1

</llo_original>
